<compile_context>
chip_gen: v7x
topology: tpu7x:2x2x1
jax: 0.10.0
libtpu: 0.0.40
codegen_flags: <defaults>
</compile_context>

<pallas_src>
import jax
import jax.numpy as jnp
from jax.experimental import pallas as pl
from jax.experimental.pallas import tpu as pltpu


# --------------------------------------------------------------------------
# Kernel A: fused im2col-GEMM + folded-BN bias + ReLU
# --------------------------------------------------------------------------
def _conv_bn_relu_kernel(p_ref, w_ref, b_ref, o_ref):
    # p_ref: (block_m, K) patches   w_ref: (K, Cout) BN-scaled conv weights
    # b_ref: (1, Cout) folded BN bias   o_ref: (block_m, Cout)
    acc = jnp.dot(p_ref[...], w_ref[...], preferred_element_type=jnp.float32)
    y = acc + b_ref[...]
    o_ref[...] = jnp.maximum(y, 0.0).astype(o_ref.dtype)


def _conv_bn_relu(patches, w_folded, bias, *, block_m=256):
    m, k = patches.shape
    k2, cout = w_folded.shape
    assert k == k2
    grid_m = pl.cdiv(m, block_m)
    mp = grid_m * block_m
    if mp != m:  # pad rows instead of asserting divisibility
        patches = jnp.pad(patches, ((0, mp - m), (0, 0)))

    cost = pl.CostEstimate(
        flops=2 * mp * k * cout,
        transcendentals=0,
        bytes_accessed=4 * (mp * k + k * cout + mp * cout),
    )
    out = pl.pallas_call(
        _conv_bn_relu_kernel,
        out_shape=jax.ShapeDtypeStruct((mp, cout), patches.dtype),
        grid_spec=pltpu.PrefetchScalarGridSpec(
            num_scalar_prefetch=0,
            grid=(grid_m,),
            in_specs=[
                pl.BlockSpec((block_m, k), lambda i: (i, 0)),
                pl.BlockSpec((k, cout), lambda i: (0, 0)),   # weights resident
                pl.BlockSpec((1, cout), lambda i: (0, 0)),   # bias resident
            ],
            out_specs=pl.BlockSpec((block_m, cout), lambda i: (i, 0)),
        ),
        compiler_params=pltpu.CompilerParams(
            dimension_semantics=("parallel",)),
        cost_estimate=cost,
    )(patches, w_folded, bias)
    return out[:m]


# --------------------------------------------------------------------------
# Kernel B: maxpool 3x3 / stride 2 / pad 1 on parity-split planes
# --------------------------------------------------------------------------
def _maxpool3x3s2_kernel(ee_ref, eo_ref, oe_ref, oo_ref, o_ref):
    # Parity planes of the -inf padded activation z (pad 1 on each side):
    #   ee[pr, pc] = z[2pr,   2pc]    eo[pr, pc] = z[2pr,   2pc+1]
    #   oe[pr, pc] = z[2pr+1, 2pc]    oo[pr, pc] = z[2pr+1, 2pc+1]
    # Window for output (py, px) covers padded rows {2py, 2py+1, 2py+2} and
    # cols {2px, 2px+1, 2px+2}  ->  only unit-stride slices below.
    ph, pw = o_ref.shape[1], o_ref.shape[2]
    ee = ee_ref[0]
    eo = eo_ref[0]
    oe = oe_ref[0]
    oo = oo_ref[0]
    m = jnp.maximum(jnp.maximum(ee[:ph, :pw], ee[:ph, 1:pw + 1]),
                    jnp.maximum(ee[1:ph + 1, :pw], ee[1:ph + 1, 1:pw + 1]))
    m = jnp.maximum(m, jnp.maximum(eo[:ph, :pw], eo[1:ph + 1, :pw]))
    m = jnp.maximum(m, jnp.maximum(oe[:ph, :pw], oe[:ph, 1:pw + 1]))
    m = jnp.maximum(m, oo[:ph, :pw])
    o_ref[0] = m


def _maxpool_3x3_s2_p1(y_nhwc):
    n, h, w, c = y_nhwc.shape
    ph = (h + 2 - 3) // 2 + 1
    pw = (w + 2 - 3) // 2 + 1
    neg = jnp.finfo(y_nhwc.dtype).min
    pad_h = (1, 2 * ph + 2 - (h + 1))
    pad_w = (1, 2 * pw + 2 - (w + 1))
    z = jnp.pad(y_nhwc, ((0, 0), pad_h, pad_w, (0, 0)), constant_values=neg)
    # Layout glue only (no compute): split into row/col parity planes.
    ee = z[:, 0::2, 0::2, :]
    eo = z[:, 0::2, 1::2, :]
    oe = z[:, 1::2, 0::2, :]
    oo = z[:, 1::2, 1::2, :]

    in_spec = pl.BlockSpec((1, ph + 1, pw + 1, c), lambda i: (i, 0, 0, 0))
    return pl.pallas_call(
        _maxpool3x3s2_kernel,
        out_shape=jax.ShapeDtypeStruct((n, ph, pw, c), y_nhwc.dtype),
        grid_spec=pltpu.PrefetchScalarGridSpec(
            num_scalar_prefetch=0,
            grid=(n,),
            in_specs=[in_spec] * 4,
            out_specs=pl.BlockSpec((1, ph, pw, c), lambda i: (i, 0, 0, 0)),
        ),
        compiler_params=pltpu.CompilerParams(
            dimension_semantics=("parallel",)),
    )(ee, eo, oe, oo)


# --------------------------------------------------------------------------
# Full forward: conv1 -> bn1 -> relu -> maxpool  (NCHW in, NCHW out)
# --------------------------------------------------------------------------
def visible_module_forward(x_nchw, params, *, block_m=256):
    conv_w = params["conv_w"]                      # (64, 3, 7, 7) OIHW
    gamma, beta = params["gamma"], params["beta"]
    mean, var, eps = params["mean"], params["var"], params["eps"]

    n, cin, h, w = x_nchw.shape
    cout, cin2, kh, kw = conv_w.shape
    assert cin == cin2

    oh = (h + 2 * 3 - kh) // 2 + 1
    ow = (w + 2 * 3 - kw) // 2 + 1

    # Layout glue: NCHW -> NHWC (3 channels, cheap), zero-pad, im2col patches.
    x_nhwc = jnp.transpose(x_nchw, (0, 2, 3, 1))
    xp = jnp.pad(x_nhwc, ((0, 0), (3, 3), (3, 3), (0, 0)))
    taps = []
    for ky in range(kh):
        for kx in range(kw):
            taps.append(xp[:, ky:ky + 2 * oh:2, kx:kx + 2 * ow:2, :])
    patches = jnp.concatenate(taps, axis=-1).reshape(n * oh * ow, kh * kw * cin)

    # Fold eval-mode BN into the GEMM weights / bias (rsqrt outside the kernel).
    scale = gamma * jax.lax.rsqrt(var + eps)                     # (cout,)
    bias = (beta - mean * scale).reshape(1, cout).astype(jnp.float32)
    w2d = jnp.transpose(conv_w, (2, 3, 1, 0)).reshape(kh * kw * cin, cout)
    w_folded = (w2d * scale[None, :]).astype(jnp.float32)

    y = _conv_bn_relu(patches, w_folded, bias, block_m=block_m)
    y_nhwc = y.reshape(n, oh, ow, cout)

    p_nhwc = _maxpool_3x3_s2_p1(y_nhwc)
    return jnp.transpose(p_nhwc, (0, 3, 1, 2))                   # back to NCHW


# --------------------------------------------------------------------------
# Pure-JAX reference (XLA conv / reduce_window) for verification
# --------------------------------------------------------------------------
def _reference(x_nchw, params):
    conv_w = params["conv_w"]
    gamma, beta = params["gamma"], params["beta"]
    mean, var, eps = params["mean"], params["var"], params["eps"]
    y = jax.lax.conv_general_dilated(
        x_nchw, conv_w, window_strides=(2, 2), padding=((3, 3), (3, 3)),
        dimension_numbers=("NCHW", "OIHW", "NCHW"))
    s = (gamma * jax.lax.rsqrt(var + eps))[None, :, None, None]
    y = (y - mean[None, :, None, None]) * s + beta[None, :, None, None]
    y = jnp.maximum(y, 0.0)
    return jax.lax.reduce_window(
        y, -jnp.inf, jax.lax.max,
        window_dimensions=(1, 1, 3, 3), window_strides=(1, 1, 2, 2),
        padding=((0, 0), (0, 0), (1, 1), (1, 1)))


if __name__ == "__main__":
    key = jax.random.PRNGKey(0)
    kx, kwt, kg, kb, km, kv = jax.random.split(key, 6)

    x = jax.random.normal(kx, (2, 3, 32, 32), dtype=jnp.float32)
    params = dict(
        conv_w=jax.random.normal(kwt, (64, 3, 7, 7), dtype=jnp.float32) * 0.1,
        gamma=jax.random.uniform(kg, (64,), jnp.float32, 0.5, 1.5),
        beta=jax.random.normal(kb, (64,), dtype=jnp.float32) * 0.1,
        mean=jax.random.normal(km, (64,), dtype=jnp.float32) * 0.1,
        var=jax.random.uniform(kv, (64,), jnp.float32, 0.5, 1.5),
        eps=1e-5,
    )

    out = visible_module_forward(x, params)
    out = jax.block_until_ready(out)

    ref = _reference(x, params)
    assert out.shape == ref.shape == (2, 64, 8, 8), out.shape
    assert out.dtype == x.dtype
    assert jnp.allclose(out, ref, atol=1e-4, rtol=1e-4), \
        float(jnp.max(jnp.abs(out - ref)))

    print("KERNEL_OK")
</pallas_src>

<mosaic_0001>
module attributes {stable_mosaic.version = 11 : i64} {
  func.func @_conv_bn_relu_kernel(%arg0: i32, %arg1: memref<256x147xf32, #tpu.memory_space<vmem>>, %arg2: memref<147x64xf32, #tpu.memory_space<vmem>>, %arg3: memref<1x64xf32, #tpu.memory_space<vmem>>, %arg4: memref<256x64xf32, #tpu.memory_space<vmem>>) attributes {dimension_semantics = [#tpu.dimension_semantics<parallel>], iteration_bounds = array<i64: 2>, scalar_prefetch = 0 : i64, scratch_operands = 0 : i64, tpu.core_type = #tpu.core_type<tc>, window_params = [{transform_indices = @transform_0, window_bounds = array<i64: 256, 147>}, {pipeline_mode = #tpu.pipeline_mode<synchronous>, transform_indices = @transform_1, window_bounds = array<i64: 147, 64>}, {pipeline_mode = #tpu.pipeline_mode<synchronous>, transform_indices = @transform_2, window_bounds = array<i64: 1, 64>}, {transform_indices = @transform_3, window_bounds = array<i64: 256, 64>}]} {
    %c0 = arith.constant 0 : index
    %c0_0 = arith.constant 0 : index
    %0 = vector.load %arg1[%c0, %c0_0] : memref<256x147xf32, #tpu.memory_space<vmem>>, vector<256x147xf32>
    %c0_1 = arith.constant 0 : index
    %c0_2 = arith.constant 0 : index
    %1 = vector.load %arg2[%c0_1, %c0_2] : memref<147x64xf32, #tpu.memory_space<vmem>>, vector<147x64xf32>
    %cst = arith.constant dense<0.000000e+00> : vector<256x64xf32>
    %2 = tpu.matmul %0, %1, %cst {dimension_numbers = #tpu.dot_dimension_numbers<[1], [0], [0], [1], [0, 0, 1, 1], [], []>} : vector<256x147xf32>, vector<147x64xf32>, vector<256x64xf32> -> vector<256x64xf32>
    %c0_3 = arith.constant 0 : index
    %c0_4 = arith.constant 0 : index
    %3 = vector.load %arg3[%c0_3, %c0_4] : memref<1x64xf32, #tpu.memory_space<vmem>>, vector<1x64xf32>
    %4 = vector.broadcast %3 : vector<1x64xf32> to vector<256x64xf32>
    %5 = arith.addf %2, %4 : vector<256x64xf32>
    %cst_5 = arith.constant 0.000000e+00 : f32
    %6 = vector.broadcast %cst_5 : f32 to vector<256x64xf32>
    %7 = arith.maximumf %5, %6 : vector<256x64xf32>
    %c0_6 = arith.constant 0 : index
    %c0_7 = arith.constant 0 : index
    %8 = vector.load %arg4[%c0_6, %c0_7] : memref<256x64xf32, #tpu.memory_space<vmem>>, vector<256x64xf32>
    tpu.vector_store %arg4[%c0_6, %c0_7], %7 {strides = array<i32>} : memref<256x64xf32, #tpu.memory_space<vmem>>, vector<256x64xf32>,
    return
  }
  func.func @transform_0(%arg0: i32) -> (i32, i32) {
    %c0_i32 = arith.constant 0 : i32
    %c0_i32_0 = arith.constant 0 : i32
    return %arg0, %c0_i32 : i32, i32
  }
  func.func @transform_1(%arg0: i32) -> (i32, i32) {
    %c0_i32 = arith.constant 0 : i32
    %c0_i32_0 = arith.constant 0 : i32
    %c0_i32_1 = arith.constant 0 : i32
    return %c0_i32, %c0_i32_0 : i32, i32
  }
  func.func @transform_2(%arg0: i32) -> (i32, i32) {
    %c0_i32 = arith.constant 0 : i32
    %c0_i32_0 = arith.constant 0 : i32
    %c0_i32_1 = arith.constant 0 : i32
    return %c0_i32, %c0_i32_0 : i32, i32
  }
  func.func @transform_3(%arg0: i32) -> (i32, i32) {
    %c0_i32 = arith.constant 0 : i32
    %c0_i32_0 = arith.constant 0 : i32
    return %arg0, %c0_i32 : i32, i32
  }
}

</mosaic_0001>

<llo_original>
// kernel: tpu_custom_call.1
$region0: #{tpu_custom_call.1}
  #allocation0 [shape = 'u32[]', space=smem, size = 0x4, offset = 0x4, fixed_abs, tag = 'smem constant byte address 0x4 - core index']
  #allocation1 [shape = 'u32[144,128]{1,0:T(1,128)}', space=vmem, size = 0x12000, scoped, tag = 'internal scratch']
  %s0 = inlined_call_operand.vmem [shape: f32[512,147], index: 0, kind: input, shape index: {}]
  %s1 = inlined_call_operand.vmem [shape: f32[147,64], index: 1, kind: input, shape index: {}]
  %s2 = inlined_call_operand.vmem [shape: f32[1,64], index: 2, kind: input, shape index: {}]
  %s3 = inlined_call_operand.vmem [shape: f32[512,64], index: 3, kind: output, shape index: {}]
  %s4 = sld [smem:[#allocation0]]
  $region45: #{tpu_custom_call.1} parent=0
    _
  %s6 = ssub.s32 1, %s4
  %s7 = scalar_select 0, %s6, %s4
  loop: start=0, step=1, limit=4
  $region2: #{tpu_custom_call.1} parent=0 // loop_pre_header
    _
  $region3: #{tpu_custom_call.1} parent=0 // loop_header
    %s9 = sphi 0, %s13
    %p10 = scmp.ge.s32.totalorder %s9, 4
    %s19 = sphi 0, %s21
    %s22 = sphi 0, %s19
    %s23 = sphi 0, %s22
    %s39 = sphi 0, %s23
    %s43 = sphi 0, %s43
    %s45 = sphi 0, %s43
    %s46 = sphi 0, %s45
    %s60 = sphi 0, %s46
    %s64 = sphi 0, %s64
    %s66 = sphi 0, %s64
    %s67 = sphi 0, %s66
    %s81 = sphi 0, %s67
    %s87 = sphi 0, %s89
    %s90 = sphi 0, %s87
    %s91 = sphi 0, %s90
    %s107 = sphi 0, %s91
  $region4: #{tpu_custom_call.1} parent=0 // loop_header_branch
    %12 = sbr.rel (%p10) target = $region8
  $region5: #{tpu_custom_call.1} parent=0 // loop_body
    %s14 = ssub.s32 %s9, 1
    %s15 = ssub.s32 %s9, 2
    %s16 = sadd.s32 %s9, 1
    %s17 = ssub.s32 %s9, %s16
    %p18 = scmp.eq.s32.totalorder %s17, 0
    %s20 = sadd.s32 %s19, 1
    %s21 = scalar_select %p18, %s19, %s20
    %p24 = pneg %p18
    %p25 = scmp.eq.s32.totalorder %s9, 1
    %p26 = por %p24, %p25
    %p27 = scmp.ne.s32.totalorder %s19, %s22
    %p28 = scmp.eq.s32.totalorder %s9, 0
    %p29 = por %p27, %p28
    %p30 = scmp.ne.s32.totalorder %s19, %s22
    %p31 = scmp.eq.s32.totalorder %s14, 1
    %p32 = por %p30, %p31
    %p33 = scmp.ne.s32.totalorder %s22, %s23
    %p34 = scmp.eq.s32.totalorder %s14, 0
    %p35 = por %p33, %p34
    %p36 = scmp.ne.s32.totalorder %s22, %s23
    %p37 = scmp.eq.s32.totalorder %s15, 1
    %p38 = por %p36, %p37
    %p40 = scmp.ne.s32.totalorder %s23, %s39
    %p41 = scmp.eq.s32.totalorder %s15, 0
    %p42 = por %p40, %p41
    %s44 = sadd.s32 %s43, 1
    %p47 = scmp.eq.s32.totalorder %s9, 1
    %p48 = scmp.ne.s32.totalorder %s43, %s45
    %p49 = scmp.eq.s32.totalorder %s9, 0
    %p50 = por %p48, %p49
    %p51 = scmp.ne.s32.totalorder %s43, %s45
    %p52 = scmp.eq.s32.totalorder %s14, 1
    %p53 = por %p51, %p52
    %p54 = scmp.ne.s32.totalorder %s45, %s46
    %p55 = scmp.eq.s32.totalorder %s14, 0
    %p56 = por %p54, %p55
    %p57 = scmp.ne.s32.totalorder %s45, %s46
    %p58 = scmp.eq.s32.totalorder %s15, 1
    %p59 = por %p57, %p58
    %p61 = scmp.ne.s32.totalorder %s46, %s60
    %p62 = scmp.eq.s32.totalorder %s15, 0
    %p63 = por %p61, %p62
    %s65 = sadd.s32 %s64, 1
    %p68 = scmp.eq.s32.totalorder %s9, 1
    %p69 = scmp.ne.s32.totalorder %s64, %s66
    %p70 = scmp.eq.s32.totalorder %s9, 0
    %p71 = por %p69, %p70
    %p72 = scmp.ne.s32.totalorder %s64, %s66
    %p73 = scmp.eq.s32.totalorder %s14, 1
    %p74 = por %p72, %p73
    %p75 = scmp.ne.s32.totalorder %s66, %s67
    %p76 = scmp.eq.s32.totalorder %s14, 0
    %p77 = por %p75, %p76
    %p78 = scmp.ne.s32.totalorder %s66, %s67
    %p79 = scmp.eq.s32.totalorder %s15, 1
    %p80 = por %p78, %p79
    %p82 = scmp.ne.s32.totalorder %s67, %s81
    %p83 = scmp.eq.s32.totalorder %s15, 0
    %p84 = por %p82, %p83
    %s85 = ssub.s32 %s9, %s16
    %p86 = scmp.eq.s32.totalorder %s85, 0
    %s88 = sadd.s32 %s87, 1
    %s89 = scalar_select %p86, %s87, %s88
    %p92 = pneg %p86
    %p93 = scmp.eq.s32.totalorder %s9, 1
    %p94 = por %p92, %p93
    %p95 = scmp.ne.s32.totalorder %s87, %s90
    %p96 = scmp.eq.s32.totalorder %s9, 0
    %p97 = por %p95, %p96
    %p98 = scmp.ne.s32.totalorder %s87, %s90
    %p99 = scmp.eq.s32.totalorder %s14, 1
    %p100 = por %p98, %p99
    %p101 = scmp.ne.s32.totalorder %s90, %s91
    %p102 = scmp.eq.s32.totalorder %s14, 0
    %p103 = por %p101, %p102
    %p104 = scmp.ne.s32.totalorder %s90, %s91
    %p105 = scmp.eq.s32.totalorder %s15, 1
    %p106 = por %p104, %p105
    %p108 = scmp.ne.s32.totalorder %s91, %s107
    %p109 = scmp.eq.s32.totalorder %s15, 0
    %p110 = por %p108, %p109
    %p111 = scmp.le.s32.totalorder 1, %s9
    %p112 = scmp.lt.s32.totalorder %s9, 3
    %p113 = pnand %p111, %p112
    %p114 = pneg %p113
    // Predicated region
    $region9: #{tpu_custom_call.1} parent=5 // pred_check
      _
    $region10: #{tpu_custom_call.1} parent=5 // pred_check_branch
      %116 = sbr.rel (%p113) target = $region12
    $region11: #{tpu_custom_call.1} parent=5 // pred_region
      %s117 = ssub.s32 %s9, 1
      // Predicated region
      $region13: #{tpu_custom_call.1} parent=11 // pred_check
        %p118 = pneg %p56
      $region14: #{tpu_custom_call.1} parent=11 // pred_check_branch
        %120 = sbr.rel (%p118) target = $region16
      $region15: #{tpu_custom_call.1} parent=11 // pred_region
        _
      $region16: #{tpu_custom_call.1} parent=11 // pred_fallthru
        _
      // Predicated region
      $region17: #{tpu_custom_call.1} parent=11 // pred_check
        %p121 = pneg %p77
      $region18: #{tpu_custom_call.1} parent=11 // pred_check_branch
        %123 = sbr.rel (%p121) target = $region20
      $region19: #{tpu_custom_call.1} parent=11 // pred_region
        _
      $region20: #{tpu_custom_call.1} parent=11 // pred_fallthru
        _
    $region12: #{tpu_custom_call.1} parent=5 // pred_fallthru
      _
    %p124 = scmp.lt.s32.totalorder %s9, 2
    // Predicated region
    $region21: #{tpu_custom_call.1} parent=5 // pred_check
      %p125 = pneg %p124
    $region22: #{tpu_custom_call.1} parent=5 // pred_check_branch
      %127 = sbr.rel (%p125) target = $region24
    $region23: #{tpu_custom_call.1} parent=5 // pred_region
      // Predicated region
      $region25: #{tpu_custom_call.1} parent=23 // pred_check
        %p128 = pneg %p29
      $region26: #{tpu_custom_call.1} parent=23 // pred_check_branch
        %130 = sbr.rel (%p128) target = $region28
      $region27: #{tpu_custom_call.1} parent=23 // pred_region
        %s131 = smul.u32 32, %s9
        %p132 = scmp.lt.s32.totalorder %s131, 63
        %s133 = scalar_select %p132, %s131, 63
        %s134 = smul.addr %s133, 2
        %s135 = smul.addr %s134, 8
        %s136 = scalar_lea.vmem %s0, %s135
        %s137 = smul.u32 32, %s9
      $region28: #{tpu_custom_call.1} parent=23 // pred_fallthru
        _
    $region24: #{tpu_custom_call.1} parent=5 // pred_fallthru
      _
    %p138 = scmp.le.s32.totalorder 1, %s9
    %p139 = scmp.lt.s32.totalorder %s9, 3
    %p140 = pnand %p138, %p139
    %p141 = pneg %p140
    // Predicated region
    $region29: #{tpu_custom_call.1} parent=5 // pred_check
      _
    $region30: #{tpu_custom_call.1} parent=5 // pred_check_branch
      %143 = sbr.rel (%p140) target = $region32
    $region31: #{tpu_custom_call.1} parent=5 // pred_region
      %s144 = ssub.s32 %s9, 1
      %s145 = smul.u32 32, %s14
      %p146 = scmp.lt.s32.totalorder %s145, 63
      %s147 = scalar_select %p146, %s145, 63
      %s148 = smul.addr %s147, 2
      %s149 = smul.addr %s148, 8
      %s150 = scalar_lea.vmem %s0, %s149
      %p151 = pneg %p35
      %p152 = pneg %p32
      %p153 = pneg %p56
      %p154 = pneg %p53
      %p155 = pneg %p77
      %p156 = pneg %p74
      %p157 = pneg %p103
      %p158 = pneg %p100
      %s159 = smul.u32 32, %s14
      %p160 = scmp.lt.s32.totalorder %s159, 63
      %s161 = scalar_select %p160, %s159, 63
      %s162 = smul.addr %s161, 8
      %s163 = scalar_lea.vmem %s3, %s162
      %s164 = smul.u32 32, %s14
      %p165 = scmp.lt.s32.totalorder %s164, 63
      %s166 = scalar_select %p165, %s164, 63
      %s167 = smul.addr %s166, 2
      %s168 = smul.addr %s167, 8
      %s169 = scalar_lea.vmem %s0, %s168
      %s170 = smul.u32 32, %s14
      %s171 = smul.u32 32, %s14
      %p172 = scmp.lt.s32.totalorder %s171, 63
      %s173 = scalar_select %p172, %s171, 63
      %s174 = smul.addr %s173, 8
      %s175 = scalar_lea.vmem %s3, %s174
      %s176 = smul.u32 32, %s14
      %v177 = vld [vmem:[%s169] sm:$0xff]
      %v178 = vld [vmem:[%s169 + $0x8] sm:$0xff]
      %v179 = vld [vmem:[%s169 + $0x10] sm:$0xff]
      %v180 = vld [vmem:[%s169 + $0x18] sm:$0xff]
      %v181 = vld [vmem:[%s169 + $0x20] sm:$0xff]
      %v182 = vld [vmem:[%s169 + $0x28] sm:$0xff]
      %v183 = vld [vmem:[%s169 + $0x30] sm:$0xff]
      %v184 = vld [vmem:[%s169 + $0x38] sm:$0xff]
      %v185 = vld [vmem:[%s169 + $0x40] sm:$0xff]
      %v186 = vld [vmem:[%s169 + $0x48] sm:$0xff]
      %v187 = vld [vmem:[%s169 + $0x50] sm:$0xff]
      %v188 = vld [vmem:[%s169 + $0x58] sm:$0xff]
      %v189 = vld [vmem:[%s169 + $0x60] sm:$0xff]
      %v190 = vld [vmem:[%s169 + $0x68] sm:$0xff]
      %v191 = vld [vmem:[%s169 + $0x70] sm:$0xff]
      %v192 = vld [vmem:[%s169 + $0x78] sm:$0xff]
      %v193 = vld [vmem:[%s169 + $0x80] sm:$0xff]
      %v194 = vld [vmem:[%s169 + $0x88] sm:$0xff]
      %v195 = vld [vmem:[%s169 + $0x90] sm:$0xff]
      %v196 = vld [vmem:[%s169 + $0x98] sm:$0xff]
      %v197 = vld [vmem:[%s169 + $0xa0] sm:$0xff]
      %v198 = vld [vmem:[%s169 + $0xa8] sm:$0xff]
      %v199 = vld [vmem:[%s169 + $0xb0] sm:$0xff]
      %v200 = vld [vmem:[%s169 + $0xb8] sm:$0xff]
      %v201 = vld [vmem:[%s169 + $0xc0] sm:$0xff]
      %v202 = vld [vmem:[%s169 + $0xc8] sm:$0xff]
      %v203 = vld [vmem:[%s169 + $0xd0] sm:$0xff]
      %v204 = vld [vmem:[%s169 + $0xd8] sm:$0xff]
      %v205 = vld [vmem:[%s169 + $0xe0] sm:$0xff]
      %v206 = vld [vmem:[%s169 + $0xe8] sm:$0xff]
      %v207 = vld [vmem:[%s169 + $0xf0] sm:$0xff]
      %v208 = vld [vmem:[%s169 + $0xf8] sm:$0xff]
      %v209 = vld [vmem:[%s169 + $0x100] sm:$0xff]
      %v210 = vld [vmem:[%s169 + $0x108] sm:$0xff]
      %v211 = vld [vmem:[%s169 + $0x110] sm:$0xff]
      %v212 = vld [vmem:[%s169 + $0x118] sm:$0xff]
      %v213 = vld [vmem:[%s169 + $0x120] sm:$0xff]
      %v214 = vld [vmem:[%s169 + $0x128] sm:$0xff]
      %v215 = vld [vmem:[%s169 + $0x130] sm:$0xff]
      %v216 = vld [vmem:[%s169 + $0x138] sm:$0xff]
      %v217 = vld [vmem:[%s169 + $0x140] sm:$0xff]
      %v218 = vld [vmem:[%s169 + $0x148] sm:$0xff]
      %v219 = vld [vmem:[%s169 + $0x150] sm:$0xff]
      %v220 = vld [vmem:[%s169 + $0x158] sm:$0xff]
      %v221 = vld [vmem:[%s169 + $0x160] sm:$0xff]
      %v222 = vld [vmem:[%s169 + $0x168] sm:$0xff]
      %v223 = vld [vmem:[%s169 + $0x170] sm:$0xff]
      %v224 = vld [vmem:[%s169 + $0x178] sm:$0xff]
      %v225 = vld [vmem:[%s169 + $0x180] sm:$0xff]
      %v226 = vld [vmem:[%s169 + $0x188] sm:$0xff]
      %v227 = vld [vmem:[%s169 + $0x190] sm:$0xff]
      %v228 = vld [vmem:[%s169 + $0x198] sm:$0xff]
      %v229 = vld [vmem:[%s169 + $0x1a0] sm:$0xff]
      %v230 = vld [vmem:[%s169 + $0x1a8] sm:$0xff]
      %v231 = vld [vmem:[%s169 + $0x1b0] sm:$0xff]
      %v232 = vld [vmem:[%s169 + $0x1b8] sm:$0xff]
      %v233 = vld [vmem:[%s169 + $0x1c0] sm:$0xff]
      %v234 = vld [vmem:[%s169 + $0x1c8] sm:$0xff]
      %v235 = vld [vmem:[%s169 + $0x1d0] sm:$0xff]
      %v236 = vld [vmem:[%s169 + $0x1d8] sm:$0xff]
      %v237 = vld [vmem:[%s169 + $0x1e0] sm:$0xff]
      %v238 = vld [vmem:[%s169 + $0x1e8] sm:$0xff]
      %v239 = vld [vmem:[%s169 + $0x1f0] sm:$0xff]
      %v240 = vld [vmem:[%s169 + $0x1f8] sm:$0xff]
      %v241 = vld [vmem:[%s1] sm:$0xff]
      %v242 = vld [vmem:[%s1 + $0x8] sm:$0xff]
      %v243 = vld [vmem:[%s1 + $0x10] sm:$0xff]
      %v244 = vld [vmem:[%s1 + $0x18] sm:$0xff]
      %v245 = vld [vmem:[%s1 + $0x20] sm:$0xff]
      %v246 = vld [vmem:[%s1 + $0x28] sm:$0xff]
      %v247 = vld [vmem:[%s1 + $0x30] sm:$0xff]
      %v248 = vld [vmem:[%s1 + $0x38] sm:$0xff]
      %v249 = vld [vmem:[%s1 + $0x40] sm:$0xff]
      %v250 = vld [vmem:[%s1 + $0x48] sm:$0xff]
      %v251 = vld [vmem:[%s1 + $0x50] sm:$0xff]
      %v252 = vld [vmem:[%s1 + $0x58] sm:$0xff]
      %v253 = vld [vmem:[%s1 + $0x60] sm:$0xff]
      %v254 = vld [vmem:[%s1 + $0x68] sm:$0xff]
      %v255 = vld [vmem:[%s1 + $0x70] sm:$0xff]
      %v256 = vld [vmem:[%s1 + $0x78] sm:$0xff]
      %v257 = vld [vmem:[%s1 + $0x80] sm:$0xff]
      %v258 = vld [vmem:[%s1 + $0x88] sm:$0xff]
      %v259 = vld [vmem:[%s1 + $0x90] sm:$0x7]
      %v260 = vld [vmem:[%s2] sm:$0x1]
      %v262 = vlaneseq
      %v263 = vshrl.u32 %v262, 7
      %v264 = vsub.s32 0, %v263
      %v265 = vrot.slane %v260, %v264
      %vm267 = vcmask 154624
      %v269 = vsel %vm267, %v178, 0
      %v272 = vsel %vm267, %v180, 0
      %v275 = vsel %vm267, %v182, 0
      %v278 = vsel %vm267, %v184, 0
      %v281 = vsel %vm267, %v186, 0
      %v284 = vsel %vm267, %v188, 0
      %v287 = vsel %vm267, %v190, 0
      %v290 = vsel %vm267, %v192, 0
      %v293 = vsel %vm267, %v194, 0
      %v296 = vsel %vm267, %v196, 0
      %v299 = vsel %vm267, %v198, 0
      %v302 = vsel %vm267, %v200, 0
      %v305 = vsel %vm267, %v202, 0
      %v308 = vsel %vm267, %v204, 0
      %v311 = vsel %vm267, %v206, 0
      %v314 = vsel %vm267, %v208, 0
      %v317 = vsel %vm267, %v210, 0
      %v320 = vsel %vm267, %v212, 0
      %v323 = vsel %vm267, %v214, 0
      %v326 = vsel %vm267, %v216, 0
      %v329 = vsel %vm267, %v218, 0
      %v332 = vsel %vm267, %v220, 0
      %v335 = vsel %vm267, %v222, 0
      %v338 = vsel %vm267, %v224, 0
      %v341 = vsel %vm267, %v226, 0
      %v344 = vsel %vm267, %v228, 0
      %v347 = vsel %vm267, %v230, 0
      %v350 = vsel %vm267, %v232, 0
      %v353 = vsel %vm267, %v234, 0
      %v356 = vsel %vm267, %v236, 0
      %v359 = vsel %vm267, %v238, 0
      %v362 = vsel %vm267, %v240, 0
      %vm364 = vcmask 1042432
      %v366 = vsel %vm364, %v259, 0
      %368 = vmatprep.subr.mxu0 0.0
      %369 = vmatpush1.msra.mxu0 %v241
      %370 = vmatprep.subr.mxu0 0.0
      %371 = vmatpush1.msra.mxu0 %v242
      %372 = vmatprep.subr.mxu0 0.0
      %373 = vmatpush1.msra.mxu0 %v243
      %374 = vmatprep.subr.mxu0 0.0
      %375 = vmatpush1.msra.mxu0 %v244
      %376 = vmatprep.subr.mxu0 0.0
      %377 = vmatpush1.msra.mxu0 %v245
      %378 = vmatprep.subr.mxu0 0.0
      %379 = vmatpush1.msra.mxu0 %v246
      %380 = vmatprep.subr.mxu0 0.0
      %381 = vmatpush1.msra.mxu0 %v247
      %382 = vmatprep.subr.mxu0 0.0
      %383 = vmatpush1.msra.mxu0 %v248
      %384 = vmatprep.subr.mxu0 0.0
      %385 = vmatpush1.msra.mxu0 %v249
      %386 = vmatprep.subr.mxu0 0.0
      %387 = vmatpush1.msra.mxu0 %v250
      %388 = vmatprep.subr.mxu0 0.0
      %389 = vmatpush1.msra.mxu0 %v251
      %390 = vmatprep.subr.mxu0 0.0
      %391 = vmatpush1.msra.mxu0 %v252
      %392 = vmatprep.subr.mxu0 0.0
      %393 = vmatpush1.msra.mxu0 %v253
      %394 = vmatprep.subr.mxu0 0.0
      %395 = vmatpush1.msra.mxu0 %v254
      %396 = vmatprep.subr.mxu0 0.0
      %397 = vmatpush1.msra.mxu0 %v255
      %398 = vmatprep.subr.mxu0 0.0
      %399 = vmatpush1.msra.mxu0 %v256
      %400 = vmatprep.subr.mxu0 0.0
      %401 = vmatpush1.msra.mxu0 %v257
      %402 = vmatprep.subr.mxu0 0.0
      %403 = vmatpush1.msra.mxu0 %v258
      %404 = vmatprep.subr.mxu0 0.0
      %405 = vmatpush1.msra.mxu0 %v366
      %406 = vmatprep.subr.mxu0 0.0
      %407 = vmatpush1.msra.mxu0 0.0
      %408 = vmatprep.subr.mxu0 0.0
      %409 = vmatpush1.msra.mxu0 0.0
      %410 = vmatprep.subr.mxu0 0.0
      %411 = vmatpush1.msra.mxu0 0.0
      %412 = vmatprep.subr.mxu0 0.0
      %413 = vmatpush1.msra.mxu0 0.0
      %414 = vmatprep.subr.mxu0 0.0
      %415 = vmatpush1.msra.mxu0 0.0
      %416 = vmatprep.subr.mxu0 0.0
      %417 = vmatpush1.msra.mxu0 0.0
      %418 = vmatprep.subr.mxu0 0.0
      %419 = vmatpush1.msra.mxu0 0.0
      %420 = vmatprep.subr.mxu0 0.0
      %421 = vmatpush1.msra.mxu0 0.0
      %422 = vmatprep.subr.mxu0 0.0
      %423 = vmatpush1.msra.mxu0 0.0
      %424 = vmatprep.subr.mxu0 0.0
      %425 = vmatpush1.msra.mxu0 0.0
      %426 = vmatprep.subr.mxu0 0.0
      %427 = vmatpush1.msra.mxu0 0.0
      %428 = vmatprep.subr.mxu0 0.0
      %429 = vmatpush1.msra.mxu0 0.0
      %430 = vmatprep.subr.mxu0 0.0
      %431 = vmatpush1.msra.mxu0 0.0
      %432 = vmatprep.mubr.f32.mxu0 %v269
      %433 = vmatmul.mubr.f32.gmra.mrb[0].mxu0 %v177
      %v434 = vpop.f32.mrb[0].mxu0
      %v435 = vadd.f32 %v265, %v434
      %v436 = vpop.f32.mrb[0].mxu0
      %437 = vmatprep.mubr.f32.mxu0 %v272
      %438 = vmatmul.mubr.f32.gmra.mrb[0].mxu0 %v179
      %v439 = vpop.f32.mrb[0].mxu0
      %v440 = vadd.f32 %v265, %v439
      %v441 = vpop.f32.mrb[0].mxu0
      %442 = vmatprep.mubr.f32.mxu0 %v275
      %443 = vmatmul.mubr.f32.gmra.mrb[0].mxu0 %v181
      %v444 = vpop.f32.mrb[0].mxu0
      %v445 = vadd.f32 %v265, %v444
      %v446 = vpop.f32.mrb[0].mxu0
      %447 = vmatprep.mubr.f32.mxu0 %v278
      %448 = vmatmul.mubr.f32.gmra.mrb[0].mxu0 %v183
      %v449 = vpop.f32.mrb[0].mxu0
      %v450 = vadd.f32 %v265, %v449
      %v451 = vpop.f32.mrb[0].mxu0
      %452 = vmatprep.mubr.f32.mxu0 %v281
      %453 = vmatmul.mubr.f32.gmra.mrb[0].mxu0 %v185
      %v454 = vpop.f32.mrb[0].mxu0
      %v455 = vadd.f32 %v265, %v454
      %v456 = vpop.f32.mrb[0].mxu0
      %457 = vmatprep.mubr.f32.mxu0 %v284
      %458 = vmatmul.mubr.f32.gmra.mrb[0].mxu0 %v187
      %v459 = vpop.f32.mrb[0].mxu0
      %v460 = vadd.f32 %v265, %v459
      %v461 = vpop.f32.mrb[0].mxu0
      %462 = vmatprep.mubr.f32.mxu0 %v287
      %463 = vmatmul.mubr.f32.gmra.mrb[0].mxu0 %v189
      %v464 = vpop.f32.mrb[0].mxu0
      %v465 = vadd.f32 %v265, %v464
      %v466 = vpop.f32.mrb[0].mxu0
      %467 = vmatprep.mubr.f32.mxu0 %v290
      %468 = vmatmul.mubr.f32.gmra.mrb[0].mxu0 %v191
      %v469 = vpop.f32.mrb[0].mxu0
      %v470 = vadd.f32 %v265, %v469
      %v471 = vpop.f32.mrb[0].mxu0
      %472 = vmatprep.mubr.f32.mxu0 %v293
      %473 = vmatmul.mubr.f32.gmra.mrb[0].mxu0 %v193
      %v474 = vpop.f32.mrb[0].mxu0
      %v475 = vadd.f32 %v265, %v474
      %v476 = vpop.f32.mrb[0].mxu0
      %477 = vmatprep.mubr.f32.mxu0 %v296
      %478 = vmatmul.mubr.f32.gmra.mrb[0].mxu0 %v195
      %v479 = vpop.f32.mrb[0].mxu0
      %v480 = vadd.f32 %v265, %v479
      %v481 = vpop.f32.mrb[0].mxu0
      %482 = vmatprep.mubr.f32.mxu0 %v299
      %483 = vmatmul.mubr.f32.gmra.mrb[0].mxu0 %v197
      %v484 = vpop.f32.mrb[0].mxu0
      %v485 = vadd.f32 %v265, %v484
      %v486 = vpop.f32.mrb[0].mxu0
      %487 = vmatprep.mubr.f32.mxu0 %v302
      %488 = vmatmul.mubr.f32.gmra.mrb[0].mxu0 %v199
      %v489 = vpop.f32.mrb[0].mxu0
      %v490 = vadd.f32 %v265, %v489
      %v491 = vpop.f32.mrb[0].mxu0
      %492 = vmatprep.mubr.f32.mxu0 %v305
      %493 = vmatmul.mubr.f32.gmra.mrb[0].mxu0 %v201
      %v494 = vpop.f32.mrb[0].mxu0
      %v495 = vadd.f32 %v265, %v494
      %v496 = vpop.f32.mrb[0].mxu0
      %497 = vmatprep.mubr.f32.mxu0 %v308
      %498 = vmatmul.mubr.f32.gmra.mrb[0].mxu0 %v203
      %v499 = vpop.f32.mrb[0].mxu0
      %v500 = vadd.f32 %v265, %v499
      %v501 = vpop.f32.mrb[0].mxu0
      %502 = vmatprep.mubr.f32.mxu0 %v311
      %503 = vmatmul.mubr.f32.gmra.mrb[0].mxu0 %v205
      %v504 = vpop.f32.mrb[0].mxu0
      %v505 = vadd.f32 %v265, %v504
      %v506 = vpop.f32.mrb[0].mxu0
      %507 = vmatprep.mubr.f32.mxu0 %v314
      %508 = vmatmul.mubr.f32.gmra.mrb[0].mxu0 %v207
      %v509 = vpop.f32.mrb[0].mxu0
      %v510 = vadd.f32 %v265, %v509
      %v511 = vpop.f32.mrb[0].mxu0
      %512 = vmatprep.mubr.f32.mxu0 %v317
      %513 = vmatmul.mubr.f32.gmra.mrb[0].mxu0 %v209
      %v514 = vpop.f32.mrb[0].mxu0
      %v515 = vadd.f32 %v265, %v514
      %v516 = vpop.f32.mrb[0].mxu0
      %517 = vmatprep.mubr.f32.mxu0 %v320
      %518 = vmatmul.mubr.f32.gmra.mrb[0].mxu0 %v211
      %v519 = vpop.f32.mrb[0].mxu0
      %v520 = vadd.f32 %v265, %v519
      %v521 = vpop.f32.mrb[0].mxu0
      %522 = vmatprep.mubr.f32.mxu0 %v323
      %523 = vmatmul.mubr.f32.gmra.mrb[0].mxu0 %v213
      %v524 = vpop.f32.mrb[0].mxu0
      %v525 = vadd.f32 %v265, %v524
      %v526 = vpop.f32.mrb[0].mxu0
      %527 = vmatprep.mubr.f32.mxu0 %v326
      %528 = vmatmul.mubr.f32.gmra.mrb[0].mxu0 %v215
      %v529 = vpop.f32.mrb[0].mxu0
      %v530 = vadd.f32 %v265, %v529
      %v531 = vpop.f32.mrb[0].mxu0
      %532 = vmatprep.mubr.f32.mxu0 %v329
      %533 = vmatmul.mubr.f32.gmra.mrb[0].mxu0 %v217
      %v534 = vpop.f32.mrb[0].mxu0
      %v535 = vadd.f32 %v265, %v534
      %v536 = vpop.f32.mrb[0].mxu0
      %537 = vmatprep.mubr.f32.mxu0 %v332
      %538 = vmatmul.mubr.f32.gmra.mrb[0].mxu0 %v219
      %v539 = vpop.f32.mrb[0].mxu0
      %v540 = vadd.f32 %v265, %v539
      %v541 = vpop.f32.mrb[0].mxu0
      %542 = vmatprep.mubr.f32.mxu0 %v335
      %543 = vmatmul.mubr.f32.gmra.mrb[0].mxu0 %v221
      %v544 = vpop.f32.mrb[0].mxu0
      %v545 = vadd.f32 %v265, %v544
      %v546 = vpop.f32.mrb[0].mxu0
      %547 = vmatprep.mubr.f32.mxu0 %v338
      %548 = vmatmul.mubr.f32.gmra.mrb[0].mxu0 %v223
      %v549 = vpop.f32.mrb[0].mxu0
      %v550 = vadd.f32 %v265, %v549
      %v551 = vpop.f32.mrb[0].mxu0
      %552 = vmatprep.mubr.f32.mxu0 %v341
      %553 = vmatmul.mubr.f32.gmra.mrb[0].mxu0 %v225
      %v554 = vpop.f32.mrb[0].mxu0
      %v555 = vadd.f32 %v265, %v554
      %v556 = vpop.f32.mrb[0].mxu0
      %557 = vmatprep.mubr.f32.mxu0 %v344
      %558 = vmatmul.mubr.f32.gmra.mrb[0].mxu0 %v227
      %v559 = vpop.f32.mrb[0].mxu0
      %v560 = vadd.f32 %v265, %v559
      %v561 = vpop.f32.mrb[0].mxu0
      %562 = vmatprep.mubr.f32.mxu0 %v347
      %563 = vmatmul.mubr.f32.gmra.mrb[0].mxu0 %v229
      %v564 = vpop.f32.mrb[0].mxu0
      %v565 = vadd.f32 %v265, %v564
      %v566 = vpop.f32.mrb[0].mxu0
      %567 = vmatprep.mubr.f32.mxu0 %v350
      %568 = vmatmul.mubr.f32.gmra.mrb[0].mxu0 %v231
      %v569 = vpop.f32.mrb[0].mxu0
      %v570 = vadd.f32 %v265, %v569
      %v571 = vpop.f32.mrb[0].mxu0
      %572 = vmatprep.mubr.f32.mxu0 %v353
      %573 = vmatmul.mubr.f32.gmra.mrb[0].mxu0 %v233
      %v574 = vpop.f32.mrb[0].mxu0
      %v575 = vadd.f32 %v265, %v574
      %v576 = vpop.f32.mrb[0].mxu0
      %577 = vmatprep.mubr.f32.mxu0 %v356
      %578 = vmatmul.mubr.f32.gmra.mrb[0].mxu0 %v235
      %v579 = vpop.f32.mrb[0].mxu0
      %v580 = vadd.f32 %v265, %v579
      %v581 = vpop.f32.mrb[0].mxu0
      %582 = vmatprep.mubr.f32.mxu0 %v359
      %583 = vmatmul.mubr.f32.gmra.mrb[0].mxu0 %v237
      %v584 = vpop.f32.mrb[0].mxu0
      %v585 = vadd.f32 %v265, %v584
      %v586 = vpop.f32.mrb[0].mxu0
      %587 = vmatprep.mubr.f32.mxu0 %v362
      %588 = vmatmul.mubr.f32.gmra.mrb[0].mxu0 %v239
      %v589 = vpop.f32.mrb[0].mxu0
      %v590 = vadd.f32 %v265, %v589
      %v591 = vpop.f32.mrb[0].mxu0
      %592 = vdwg.mxu0
      %v593 = vmax.f32 %v435, 0.0
      %v594 = vmax.f32 %v440, 0.0
      %v595 = vmax.f32 %v445, 0.0
      %v596 = vmax.f32 %v450, 0.0
      %v597 = vmax.f32 %v455, 0.0
      %v598 = vmax.f32 %v460, 0.0
      %v599 = vmax.f32 %v465, 0.0
      %v600 = vmax.f32 %v470, 0.0
      %v601 = vmax.f32 %v475, 0.0
      %v602 = vmax.f32 %v480, 0.0
      %v603 = vmax.f32 %v485, 0.0
      %v604 = vmax.f32 %v490, 0.0
      %v605 = vmax.f32 %v495, 0.0
      %v606 = vmax.f32 %v500, 0.0
      %v607 = vmax.f32 %v505, 0.0
      %v608 = vmax.f32 %v510, 0.0
      %v609 = vmax.f32 %v515, 0.0
      %v610 = vmax.f32 %v520, 0.0
      %v611 = vmax.f32 %v525, 0.0
      %v612 = vmax.f32 %v530, 0.0
      %v613 = vmax.f32 %v535, 0.0
      %v614 = vmax.f32 %v540, 0.0
      %v615 = vmax.f32 %v545, 0.0
      %v616 = vmax.f32 %v550, 0.0
      %v617 = vmax.f32 %v555, 0.0
      %v618 = vmax.f32 %v560, 0.0
      %v619 = vmax.f32 %v565, 0.0
      %v620 = vmax.f32 %v570, 0.0
      %v621 = vmax.f32 %v575, 0.0
      %v622 = vmax.f32 %v580, 0.0
      %v623 = vmax.f32 %v585, 0.0
      %v624 = vmax.f32 %v590, 0.0
      %vm625 = vcmask 523264
      %626 = vst.msk [vmem:[%s175] sm:$0xff] %vm625, %v593
      %627 = vst.msk [vmem:[%s175 + $0x8] sm:$0xff] %vm625, %v594
      %628 = vst.msk [vmem:[%s175 + $0x10] sm:$0xff] %vm625, %v595
      %629 = vst.msk [vmem:[%s175 + $0x18] sm:$0xff] %vm625, %v596
      %630 = vst.msk [vmem:[%s175 + $0x20] sm:$0xff] %vm625, %v597
      %631 = vst.msk [vmem:[%s175 + $0x28] sm:$0xff] %vm625, %v598
      %632 = vst.msk [vmem:[%s175 + $0x30] sm:$0xff] %vm625, %v599
      %633 = vst.msk [vmem:[%s175 + $0x38] sm:$0xff] %vm625, %v600
      %634 = vst.msk [vmem:[%s175 + $0x40] sm:$0xff] %vm625, %v601
      %635 = vst.msk [vmem:[%s175 + $0x48] sm:$0xff] %vm625, %v602
      %636 = vst.msk [vmem:[%s175 + $0x50] sm:$0xff] %vm625, %v603
      %637 = vst.msk [vmem:[%s175 + $0x58] sm:$0xff] %vm625, %v604
      %638 = vst.msk [vmem:[%s175 + $0x60] sm:$0xff] %vm625, %v605
      %639 = vst.msk [vmem:[%s175 + $0x68] sm:$0xff] %vm625, %v606
      %640 = vst.msk [vmem:[%s175 + $0x70] sm:$0xff] %vm625, %v607
      %641 = vst.msk [vmem:[%s175 + $0x78] sm:$0xff] %vm625, %v608
      %642 = vst.msk [vmem:[%s175 + $0x80] sm:$0xff] %vm625, %v609
      %643 = vst.msk [vmem:[%s175 + $0x88] sm:$0xff] %vm625, %v610
      %644 = vst.msk [vmem:[%s175 + $0x90] sm:$0xff] %vm625, %v611
      %645 = vst.msk [vmem:[%s175 + $0x98] sm:$0xff] %vm625, %v612
      %646 = vst.msk [vmem:[%s175 + $0xa0] sm:$0xff] %vm625, %v613
      %647 = vst.msk [vmem:[%s175 + $0xa8] sm:$0xff] %vm625, %v614
      %648 = vst.msk [vmem:[%s175 + $0xb0] sm:$0xff] %vm625, %v615
      %649 = vst.msk [vmem:[%s175 + $0xb8] sm:$0xff] %vm625, %v616
      %650 = vst.msk [vmem:[%s175 + $0xc0] sm:$0xff] %vm625, %v617
      %651 = vst.msk [vmem:[%s175 + $0xc8] sm:$0xff] %vm625, %v618
      %652 = vst.msk [vmem:[%s175 + $0xd0] sm:$0xff] %vm625, %v619
      %653 = vst.msk [vmem:[%s175 + $0xd8] sm:$0xff] %vm625, %v620
      %654 = vst.msk [vmem:[%s175 + $0xe0] sm:$0xff] %vm625, %v621
      %655 = vst.msk [vmem:[%s175 + $0xe8] sm:$0xff] %vm625, %v622
      %656 = vst.msk [vmem:[%s175 + $0xf0] sm:$0xff] %vm625, %v623
      %657 = vst.msk [vmem:[%s175 + $0xf8] sm:$0xff] %vm625, %v624
      %s658 = smul.u32 32, %s14
      %p659 = scmp.lt.s32.totalorder %s658, 63
      %s660 = scalar_select %p659, %s658, 63
      %s661 = smul.addr %s660, 8
      %s662 = scalar_lea.vmem %s3, %s661
      // Predicated region
      $region33: #{tpu_custom_call.1} parent=31 // pred_check
        %p663 = pneg %p100
      $region34: #{tpu_custom_call.1} parent=31 // pred_check_branch
        %665 = sbr.rel (%p663) target = $region36
      $region35: #{tpu_custom_call.1} parent=31 // pred_region
        %s666 = smul.u32 32, %s14
      $region36: #{tpu_custom_call.1} parent=31 // pred_fallthru
        _
    $region32: #{tpu_custom_call.1} parent=5 // pred_fallthru
      _
    %p667 = scmp.le.s32.totalorder 2, %s9
    // Predicated region
    $region37: #{tpu_custom_call.1} parent=5 // pred_check
      %p668 = pneg %p667
    $region38: #{tpu_custom_call.1} parent=5 // pred_check_branch
      %670 = sbr.rel (%p668) target = $region40
    $region39: #{tpu_custom_call.1} parent=5 // pred_region
      %s671 = ssub.s32 %s9, 2
      // Predicated region
      $region41: #{tpu_custom_call.1} parent=39 // pred_check
        %p672 = pneg %p106
      $region42: #{tpu_custom_call.1} parent=39 // pred_check_branch
        %674 = sbr.rel (%p672) target = $region44
      $region43: #{tpu_custom_call.1} parent=39 // pred_region
        %s675 = smul.u32 32, %s15
        %p676 = scmp.lt.s32.totalorder %s675, 63
        %s677 = scalar_select %p676, %s675, 63
        %s678 = smul.addr %s677, 8
        %s679 = scalar_lea.vmem %s3, %s678
      $region44: #{tpu_custom_call.1} parent=39 // pred_fallthru
        _
    $region40: #{tpu_custom_call.1} parent=5 // pred_fallthru
      _
  $region6: #{tpu_custom_call.1} parent=0 // loop_footer
    %s13 = sadd.s32 1, %s9
  $region7: #{tpu_custom_call.1} parent=0 // loop_footer_branch
    %8 = sbr.rel target = $region3
  $region8: #{tpu_custom_call.1} parent=0 // loop_exit
    _

</llo_original>
